<compile_context>
chip_gen: v7x
topology: tpu7x:2x2x1
jax: 0.10.0
libtpu: 0.0.40
codegen_flags: <defaults>
</compile_context>

<pallas_src>
import functools

import jax
import jax.numpy as jnp
from jax.experimental import pallas as pl
from jax.experimental.pallas import tpu as pltpu

IN_F, H1_F, H2_F, OUT_F = 8, 6, 4, 1

# Packed-parameter slab layout (one (8, 128) f32 vreg; unused entries are zero).
_W1_C, _B1_C = 0, 8      # w1 (6,8) in rows 0:6 cols 0:8 ; b1 in rows 0:6 col 8
_W2_C, _B2_C = 16, 22    # w2 (4,6) in rows 0:4 cols 16:22 ; b2 in rows 0:4 col 22
_W3_C, _B3_C = 24, 28    # w3 (1,4) in row 0 cols 24:28 ; b3 at [0, 28]


def _mlp_kernel(x_ref, p_ref, o_ref, *, chunk):
    # x_ref: (TB, 8) f32 batch-major tile; p_ref: (8, 128) params; o_ref: (1, TB).
    p = p_ref[...]
    w1 = p[0:8, _W1_C:_W1_C + 8]          # (8, 8); rows 6,7 are zero padding
    b1 = p[0:8, _B1_C:_B1_C + 1]          # (8, 1)
    w2 = p[0:4, _W2_C:_W2_C + 6]          # (4, 6)
    b2 = p[0:4, _B2_C:_B2_C + 1]          # (4, 1)
    w3 = p[0:1, _W3_C:_W3_C + 4]          # (1, 4)
    b3 = p[0:1, _B3_C:_B3_C + 1]          # (1, 1)

    def vpu_dense_sigmoid(w, b, h):
        # w: (out_f, in_f), b: (out_f, 1), h: (in_f+, lanes) -> (out_f, lanes).
        out_f, in_f = w.shape
        acc = jnp.broadcast_to(b, (out_f, h.shape[1]))   # bias hoisted into init
        for k in range(in_f):                            # K<=6: unrolled VPU FMAs
            acc = acc + w[:, k:k + 1] * h[k:k + 1, :]
        return jax.nn.sigmoid(acc)                       # EUP exp + reciprocal

    n_chunks = x_ref.shape[0] // chunk
    # Statically unrolled chunk loop (review: fori_loop(unroll=True) / pl.loop):
    # keeps the live set per step to ~one chunk of x while the big tile amortizes
    # the per-grid-step DMA/dispatch overhead.
    for c in range(n_chunks):
        off = c * chunk
        xc = x_ref[pl.ds(off, chunk), :]                 # (chunk, 8), batch on sublanes
        # Layer 1 on the MXU with the contraction on the LAST dim of both operands
        # ("NT" form): the batch->lanes relayout is absorbed by the matmul datapath,
        # so there is no explicit transpose and no wrapper-side HBM round trip.
        z1 = jax.lax.dot_general(
            w1, xc, (((1,), (1,)), ((), ())),
            preferred_element_type=jnp.float32)          # (8, chunk), batch on lanes
        h1 = jax.nn.sigmoid(z1 + b1)                     # rows 6,7 junk, never read
        h2 = vpu_dense_sigmoid(w2, b2, h1)               # (4, chunk)
        y = vpu_dense_sigmoid(w3, b3, h2)                # (1, chunk)
        o_ref[:, pl.ds(off, chunk)] = y                  # lane-dense store


def _round_up(n, m):
    return ((n + m - 1) // m) * m


def pack_params(w1, b1, w2, b2, w3, b3):
    """Pack torch-layout (out,in) weights and (out,) biases into one (8,128) slab."""
    p = jnp.zeros((8, 128), jnp.float32)
    p = p.at[0:6, _W1_C:_W1_C + 8].set(w1.astype(jnp.float32))
    p = p.at[0:6, _B1_C].set(b1.astype(jnp.float32))
    p = p.at[0:4, _W2_C:_W2_C + 6].set(w2.astype(jnp.float32))
    p = p.at[0:4, _B2_C].set(b2.astype(jnp.float32))
    p = p.at[0:1, _W3_C:_W3_C + 4].set(w3.astype(jnp.float32))
    p = p.at[0, _B3_C].set(b3[0].astype(jnp.float32))
    return p


@functools.partial(jax.jit, static_argnames=("tb", "chunk"))
def mlp_forward(x, packed_params, tb=8192, chunk=256):
    """x: (B, 8) f32 -> (B, 1) f32; same semantics as the torch Model."""
    B, in_f = x.shape
    assert in_f == IN_F, in_f
    assert chunk % 128 == 0 and tb % chunk == 0, (tb, chunk)

    # Shrink the tile for small inputs; keep it a multiple of the inner chunk so
    # the unrolled in-kernel loop covers the block exactly.  Partial / overhanging
    # blocks are fine: out-of-range input rows are undefined but feed only the
    # out-of-range output columns, whose writeback is dropped by Pallas.
    tb_eff = min(tb, _round_up(B, chunk))
    grid = (pl.cdiv(B, tb_eff),)

    out = pl.pallas_call(
        functools.partial(_mlp_kernel, chunk=chunk),
        out_shape=jax.ShapeDtypeStruct((1, B), jnp.float32),
        grid=grid,
        in_specs=[
            pl.BlockSpec((tb_eff, IN_F), lambda i: (i, 0)),   # x batch tile
            pl.BlockSpec((8, 128), lambda i: (0, 0)),         # params, VMEM-resident
        ],
        out_specs=pl.BlockSpec((1, tb_eff), lambda i: (0, i)),  # lane-dense output
        compiler_params=pltpu.CompilerParams(
            # On v7x, (pltpu.CORE_PARALLEL,) would split the batch grid across both
            # TensorCores; "parallel" is the portable choice for v5e/v6e.
            dimension_semantics=("parallel",),
        ),
    )(x, packed_params)
    return out.reshape(B, 1)                  # back to PyTorch (B, 1) layout (free)


def init_params():
    # Deterministic init mirroring torch.nn.Linear's U(-1/sqrt(fan_in), 1/sqrt(fan_in)),
    # weights in PyTorch (out_features, in_features) layout, biases as (out,).
    key = jax.random.PRNGKey(42)
    ks = jax.random.split(key, 6)

    def linear(kw, kb, fan_in, fan_out):
        bound = 1.0 / float(fan_in) ** 0.5
        w = jax.random.uniform(kw, (fan_out, fan_in), jnp.float32, -bound, bound)
        b = jax.random.uniform(kb, (fan_out,), jnp.float32, -bound, bound)
        return w, b

    w1, b1 = linear(ks[0], ks[1], 8, 6)
    w2, b2 = linear(ks[2], ks[3], 6, 4)
    w3, b3 = linear(ks[4], ks[5], 4, 1)
    return w1, b1, w2, b2, w3, b3


def reference_forward(x, params):
    w1, b1, w2, b2, w3, b3 = params
    dot = functools.partial(jnp.dot, precision=jax.lax.Precision.HIGHEST)
    h1 = jax.nn.sigmoid(dot(x, w1.T) + b1)
    h2 = jax.nn.sigmoid(dot(h1, w2.T) + b2)
    return jax.nn.sigmoid(dot(h2, w3.T) + b3)


if __name__ == "__main__":
    key = jax.random.PRNGKey(0)
    params = init_params()
    packed = pack_params(*params)

    # Small demo shape (matches the torch module's Linear(8, ...) input).
    B = 2
    x = jax.random.normal(key, (B, IN_F), dtype=jnp.float32)
    out = jax.block_until_ready(mlp_forward(x, packed))
    ref = reference_forward(x, params)
    assert out.shape == (B, 1), out.shape
    # Layer 1 runs on the MXU: tolerance covers the MXU's f32 pass strategy on the
    # K=8 contraction (exact multi-pass f32 matches at ~1e-6).
    assert jnp.allclose(out, ref, atol=2e-3, rtol=0.0), (out, ref)

    # Secondary check exercising multiple grid steps, the unrolled chunk loop and
    # a partial (overhanging) last block.
    B2 = 2500
    x2 = jax.random.normal(jax.random.split(key)[1], (B2, IN_F), dtype=jnp.float32)
    out2 = jax.block_until_ready(mlp_forward(x2, packed, tb=1024, chunk=256))
    ref2 = reference_forward(x2, params)
    assert out2.shape == (B2, 1), out2.shape
    assert jnp.allclose(out2, ref2, atol=2e-3, rtol=0.0)

    print("KERNEL_OK")
</pallas_src>

<mosaic_0001>
module attributes {stable_mosaic.version = 11 : i64} {
  func.func @_mlp_kernel(%arg0: i32, %arg1: memref<256x8xf32, #tpu.memory_space<vmem>>, %arg2: memref<8x128xf32, #tpu.memory_space<vmem>>, %arg3: memref<1x256xf32, #tpu.memory_space<vmem>>) attributes {dimension_semantics = [#tpu.dimension_semantics<parallel>], iteration_bounds = array<i64: 1>, scalar_prefetch = 0 : i64, scratch_operands = 0 : i64, tpu.core_type = #tpu.core_type<tc>, window_params = [{transform_indices = @transform_0, window_bounds = array<i64: 256, 8>}, {pipeline_mode = #tpu.pipeline_mode<synchronous>, transform_indices = @transform_1, window_bounds = array<i64: 8, 128>}, {transform_indices = @transform_2, window_bounds = array<i64: 1, 256>}]} {
    %c0 = arith.constant 0 : index
    %c0_0 = arith.constant 0 : index
    %0 = vector.load %arg2[%c0, %c0_0] : memref<8x128xf32, #tpu.memory_space<vmem>>, vector<8x128xf32>
    %1 = vector.extract_strided_slice %0 {offsets = [0, 0], sizes = [8, 8], strides = [1, 1]} : vector<8x128xf32> to vector<8x8xf32>
    %2 = vector.extract_strided_slice %0 {offsets = [0, 8], sizes = [8, 1], strides = [1, 1]} : vector<8x128xf32> to vector<8x1xf32>
    %3 = vector.extract_strided_slice %0 {offsets = [0, 16], sizes = [4, 6], strides = [1, 1]} : vector<8x128xf32> to vector<4x6xf32>
    %4 = vector.extract_strided_slice %0 {offsets = [0, 22], sizes = [4, 1], strides = [1, 1]} : vector<8x128xf32> to vector<4x1xf32>
    %5 = vector.extract_strided_slice %0 {offsets = [0, 24], sizes = [1, 4], strides = [1, 1]} : vector<8x128xf32> to vector<1x4xf32>
    %6 = vector.extract_strided_slice %0 {offsets = [0, 28], sizes = [1, 1], strides = [1, 1]} : vector<8x128xf32> to vector<1x1xf32>
    %c0_1 = arith.constant 0 : index
    %c0_2 = arith.constant 0 : index
    %7 = vector.load %arg1[%c0_1, %c0_2] : memref<256x8xf32, #tpu.memory_space<vmem>>, vector<256x8xf32>
    %cst = arith.constant dense<0.000000e+00> : vector<8x256xf32>
    %8 = tpu.matmul %1, %7, %cst {dimension_numbers = #tpu.dot_dimension_numbers<[1], [1], [0], [0], [0, 0, 1, 0], [], []>} : vector<8x8xf32>, vector<256x8xf32>, vector<8x256xf32> -> vector<8x256xf32>
    %9 = vector.broadcast %2 : vector<8x1xf32> to vector<8x256xf32>
    %10 = arith.addf %8, %9 : vector<8x256xf32>
    %11 = arith.negf %10 : vector<8x256xf32>
    %12 = math.exp %11 : vector<8x256xf32>
    %cst_3 = arith.constant 1.000000e+00 : f32
    %13 = vector.broadcast %cst_3 : f32 to vector<8x256xf32>
    %14 = arith.addf %13, %12 : vector<8x256xf32>
    %15 = arith.divf %13, %14 : vector<8x256xf32>
    %16 = vector.shape_cast %4 : vector<4x1xf32> to vector<4x1xf32>
    %17 = vector.broadcast %16 : vector<4x1xf32> to vector<4x256xf32>
    %18 = vector.extract_strided_slice %3 {offsets = [0, 0], sizes = [4, 1], strides = [1, 1]} : vector<4x6xf32> to vector<4x1xf32>
    %19 = vector.extract_strided_slice %15 {offsets = [0, 0], sizes = [1, 256], strides = [1, 1]} : vector<8x256xf32> to vector<1x256xf32>
    %20 = vector.broadcast %18 : vector<4x1xf32> to vector<4x256xf32>
    %21 = vector.broadcast %19 : vector<1x256xf32> to vector<4x256xf32>
    %22 = arith.mulf %20, %21 : vector<4x256xf32>
    %23 = arith.addf %17, %22 : vector<4x256xf32>
    %24 = vector.extract_strided_slice %3 {offsets = [0, 1], sizes = [4, 1], strides = [1, 1]} : vector<4x6xf32> to vector<4x1xf32>
    %25 = vector.extract_strided_slice %15 {offsets = [1, 0], sizes = [1, 256], strides = [1, 1]} : vector<8x256xf32> to vector<1x256xf32>
    %26 = vector.broadcast %24 : vector<4x1xf32> to vector<4x256xf32>
    %27 = vector.broadcast %25 : vector<1x256xf32> to vector<4x256xf32>
    %28 = arith.mulf %26, %27 : vector<4x256xf32>
    %29 = arith.addf %23, %28 : vector<4x256xf32>
    %30 = vector.extract_strided_slice %3 {offsets = [0, 2], sizes = [4, 1], strides = [1, 1]} : vector<4x6xf32> to vector<4x1xf32>
    %31 = vector.extract_strided_slice %15 {offsets = [2, 0], sizes = [1, 256], strides = [1, 1]} : vector<8x256xf32> to vector<1x256xf32>
    %32 = vector.broadcast %30 : vector<4x1xf32> to vector<4x256xf32>
    %33 = vector.broadcast %31 : vector<1x256xf32> to vector<4x256xf32>
    %34 = arith.mulf %32, %33 : vector<4x256xf32>
    %35 = arith.addf %29, %34 : vector<4x256xf32>
    %36 = vector.extract_strided_slice %3 {offsets = [0, 3], sizes = [4, 1], strides = [1, 1]} : vector<4x6xf32> to vector<4x1xf32>
    %37 = vector.extract_strided_slice %15 {offsets = [3, 0], sizes = [1, 256], strides = [1, 1]} : vector<8x256xf32> to vector<1x256xf32>
    %38 = vector.broadcast %36 : vector<4x1xf32> to vector<4x256xf32>
    %39 = vector.broadcast %37 : vector<1x256xf32> to vector<4x256xf32>
    %40 = arith.mulf %38, %39 : vector<4x256xf32>
    %41 = arith.addf %35, %40 : vector<4x256xf32>
    %42 = vector.extract_strided_slice %3 {offsets = [0, 4], sizes = [4, 1], strides = [1, 1]} : vector<4x6xf32> to vector<4x1xf32>
    %43 = vector.extract_strided_slice %15 {offsets = [4, 0], sizes = [1, 256], strides = [1, 1]} : vector<8x256xf32> to vector<1x256xf32>
    %44 = vector.broadcast %42 : vector<4x1xf32> to vector<4x256xf32>
    %45 = vector.broadcast %43 : vector<1x256xf32> to vector<4x256xf32>
    %46 = arith.mulf %44, %45 : vector<4x256xf32>
    %47 = arith.addf %41, %46 : vector<4x256xf32>
    %48 = vector.extract_strided_slice %3 {offsets = [0, 5], sizes = [4, 1], strides = [1, 1]} : vector<4x6xf32> to vector<4x1xf32>
    %49 = vector.extract_strided_slice %15 {offsets = [5, 0], sizes = [1, 256], strides = [1, 1]} : vector<8x256xf32> to vector<1x256xf32>
    %50 = vector.broadcast %48 : vector<4x1xf32> to vector<4x256xf32>
    %51 = vector.broadcast %49 : vector<1x256xf32> to vector<4x256xf32>
    %52 = arith.mulf %50, %51 : vector<4x256xf32>
    %53 = arith.addf %47, %52 : vector<4x256xf32>
    %54 = arith.negf %53 : vector<4x256xf32>
    %55 = math.exp %54 : vector<4x256xf32>
    %cst_4 = arith.constant 1.000000e+00 : f32
    %56 = vector.broadcast %cst_4 : f32 to vector<4x256xf32>
    %57 = arith.addf %56, %55 : vector<4x256xf32>
    %58 = arith.divf %56, %57 : vector<4x256xf32>
    %59 = vector.shape_cast %6 : vector<1x1xf32> to vector<1x1xf32>
    %60 = vector.broadcast %59 : vector<1x1xf32> to vector<1x256xf32>
    %61 = vector.extract_strided_slice %5 {offsets = [0, 0], sizes = [1, 1], strides = [1, 1]} : vector<1x4xf32> to vector<1x1xf32>
    %62 = vector.extract_strided_slice %58 {offsets = [0, 0], sizes = [1, 256], strides = [1, 1]} : vector<4x256xf32> to vector<1x256xf32>
    %63 = vector.broadcast %61 : vector<1x1xf32> to vector<1x256xf32>
    %64 = arith.mulf %63, %62 : vector<1x256xf32>
    %65 = arith.addf %60, %64 : vector<1x256xf32>
    %66 = vector.extract_strided_slice %5 {offsets = [0, 1], sizes = [1, 1], strides = [1, 1]} : vector<1x4xf32> to vector<1x1xf32>
    %67 = vector.extract_strided_slice %58 {offsets = [1, 0], sizes = [1, 256], strides = [1, 1]} : vector<4x256xf32> to vector<1x256xf32>
    %68 = vector.broadcast %66 : vector<1x1xf32> to vector<1x256xf32>
    %69 = arith.mulf %68, %67 : vector<1x256xf32>
    %70 = arith.addf %65, %69 : vector<1x256xf32>
    %71 = vector.extract_strided_slice %5 {offsets = [0, 2], sizes = [1, 1], strides = [1, 1]} : vector<1x4xf32> to vector<1x1xf32>
    %72 = vector.extract_strided_slice %58 {offsets = [2, 0], sizes = [1, 256], strides = [1, 1]} : vector<4x256xf32> to vector<1x256xf32>
    %73 = vector.broadcast %71 : vector<1x1xf32> to vector<1x256xf32>
    %74 = arith.mulf %73, %72 : vector<1x256xf32>
    %75 = arith.addf %70, %74 : vector<1x256xf32>
    %76 = vector.extract_strided_slice %5 {offsets = [0, 3], sizes = [1, 1], strides = [1, 1]} : vector<1x4xf32> to vector<1x1xf32>
    %77 = vector.extract_strided_slice %58 {offsets = [3, 0], sizes = [1, 256], strides = [1, 1]} : vector<4x256xf32> to vector<1x256xf32>
    %78 = vector.broadcast %76 : vector<1x1xf32> to vector<1x256xf32>
    %79 = arith.mulf %78, %77 : vector<1x256xf32>
    %80 = arith.addf %75, %79 : vector<1x256xf32>
    %81 = arith.negf %80 : vector<1x256xf32>
    %82 = math.exp %81 : vector<1x256xf32>
    %cst_5 = arith.constant 1.000000e+00 : f32
    %83 = vector.broadcast %cst_5 : f32 to vector<1x256xf32>
    %84 = arith.addf %83, %82 : vector<1x256xf32>
    %85 = arith.divf %83, %84 : vector<1x256xf32>
    %c0_6 = arith.constant 0 : index
    %c0_7 = arith.constant 0 : index
    %86 = vector.load %arg3[%c0_6, %c0_7] : memref<1x256xf32, #tpu.memory_space<vmem>>, vector<1x256xf32>
    tpu.vector_store %arg3[%c0_6, %c0_7], %85 {strides = array<i32>} : memref<1x256xf32, #tpu.memory_space<vmem>>, vector<1x256xf32>,
    return
  }
  func.func @transform_0(%arg0: i32) -> (i32, i32) {
    %c0_i32 = arith.constant 0 : i32
    %c0_i32_0 = arith.constant 0 : i32
    return %arg0, %c0_i32 : i32, i32
  }
  func.func @transform_1(%arg0: i32) -> (i32, i32) {
    %c0_i32 = arith.constant 0 : i32
    %c0_i32_0 = arith.constant 0 : i32
    %c0_i32_1 = arith.constant 0 : i32
    return %c0_i32, %c0_i32_0 : i32, i32
  }
  func.func @transform_2(%arg0: i32) -> (i32, i32) {
    %c0_i32 = arith.constant 0 : i32
    %c0_i32_0 = arith.constant 0 : i32
    return %c0_i32, %arg0 : i32, i32
  }
}

</mosaic_0001>

<llo_original>
// kernel: mlp_forward.1
$region0: #{mlp_forward.1}
  #allocation0 [shape = 'u32[]', space=smem, size = 0x4, offset = 0x4, fixed_abs, tag = 'smem constant byte address 0x4 - core index']
  #allocation1 [shape = 'u32[144,128]{1,0:T(1,128)}', space=vmem, size = 0x12000, scoped, tag = 'internal scratch']
  %s0 = inlined_call_operand.hbm [shape: f32[2,8], index: 0, kind: input, shape index: {}]
  %s1 = inlined_call_operand.hbm [shape: f32[8,128], index: 1, kind: input, shape index: {}]
  %s2 = inlined_call_operand.hbm [shape: f32[1,2], index: 2, kind: output, shape index: {}]
  %s3 = sld [smem:[#allocation0]]
  $region26: #{mlp_forward.1} parent=0
    _
  %s5 = ssub.s32 1, %s3
  %s6 = scalar_select 0, %s5, %s3
  $region1: #{mlp_forward.1} parent=0
    #allocation2 [shape = 'u8[131072]{0}', space=vmem, size = 0x20000, scoped, tag = 'input window, operand 0, single buffered']
    #allocation3 [shape = 's32[1]{0}', space=sflag, size = 0x4, scoped, tag = 'scoped memory for mlp_forward.1']
    #allocation4 [shape = 's32[1]{0}', space=sflag, size = 0x4, scoped, tag = 'scoped memory for mlp_forward.1']
    #allocation5 [shape = 'u8[4096]{0}', space=vmem, size = 0x1000, scoped, tag = 'input window, operand 1, single buffered']
    #allocation6 [shape = 's32[1]{0}', space=sflag, size = 0x4, scoped, tag = 'scoped memory for mlp_forward.1']
    #allocation7 [shape = 'u8[1024]{0}', space=vmem, size = 0x400, scoped, tag = 'output window, operand 0, single buffered']
    %7 = vsyncpa [#allocation3], 0
    %8 = vsyncpa [#allocation6], 0
    %9 = vsyncpa [#allocation4], 0
    // Predicated region
    $region2: #{mlp_forward.1} parent=1 // pred_check
      _
    $region3: #{mlp_forward.1} parent=1 // pred_check_branch
      %11 = sbr.rel (0) target = $region5
    $region4: #{mlp_forward.1} parent=1 // pred_region
      %s13 = ssub.s32 4096, 32
      %14 = vsyncadd [#allocation3], %s13
      %s15 = sshll.u32 [#allocation2], 4
      %s16 = int_to_ptr.vmem [resolvable:$true] %s15
      %21 = dma.hbm_to_vmem [thread:$0]  %s0, 32, %s16, [#allocation3], 32, 32, 2
    $region5: #{mlp_forward.1} parent=1 // pred_fallthru
      _
    // Predicated region
    $region6: #{mlp_forward.1} parent=1 // pred_check
      _
    $region7: #{mlp_forward.1} parent=1 // pred_check_branch
      %23 = sbr.rel (0) target = $region9
    $region8: #{mlp_forward.1} parent=1 // pred_region
      %s25 = ssub.s32 128, 128
      %26 = vsyncadd [#allocation6], %s25
      %s28 = sshll.u32 [#allocation5], 4
      %s29 = int_to_ptr.vmem [resolvable:$true] %s28
      %31 = dma.hbm_to_vmem [thread:$0]  %s1, 128, %s29, [#allocation6]
    $region9: #{mlp_forward.1} parent=1 // pred_fallthru
      _
    // Predicated region
    $region10: #{mlp_forward.1} parent=1 // pred_check
      _
    $region11: #{mlp_forward.1} parent=1 // pred_check_branch
      %33 = sbr.rel (0) target = $region13
    $region12: #{mlp_forward.1} parent=1 // pred_region
      %34 = dma.done [#allocation3], 4096
    $region13: #{mlp_forward.1} parent=1 // pred_fallthru
      _
    // Predicated region
    $region14: #{mlp_forward.1} parent=1 // pred_check
      _
    $region15: #{mlp_forward.1} parent=1 // pred_check_branch
      %36 = sbr.rel (0) target = $region17
    $region16: #{mlp_forward.1} parent=1 // pred_region
      %37 = dma.done [#allocation6], 128
    $region17: #{mlp_forward.1} parent=1 // pred_fallthru
      _
    %v38 = vld [vmem:[#allocation5] sm:$0xff]
    %v39 = vld [vmem:[#allocation2] sm:$0xff]
    %v40 = vld [vmem:[#allocation2 + $0x8] sm:$0xff]
    %v41 = vld [vmem:[#allocation2 + $0x10] sm:$0xff]
    %v42 = vld [vmem:[#allocation2 + $0x18] sm:$0xff]
    %v43 = vld [vmem:[#allocation2 + $0x20] sm:$0xff]
    %v44 = vld [vmem:[#allocation2 + $0x28] sm:$0xff]
    %v45 = vld [vmem:[#allocation2 + $0x30] sm:$0xff]
    %v46 = vld [vmem:[#allocation2 + $0x38] sm:$0xff]
    %v47 = vld [vmem:[#allocation2 + $0x40] sm:$0xff]
    %v48 = vld [vmem:[#allocation2 + $0x48] sm:$0xff]
    %v49 = vld [vmem:[#allocation2 + $0x50] sm:$0xff]
    %v50 = vld [vmem:[#allocation2 + $0x58] sm:$0xff]
    %v51 = vld [vmem:[#allocation2 + $0x60] sm:$0xff]
    %v52 = vld [vmem:[#allocation2 + $0x68] sm:$0xff]
    %v53 = vld [vmem:[#allocation2 + $0x70] sm:$0xff]
    %v54 = vld [vmem:[#allocation2 + $0x78] sm:$0xff]
    %v55 = vld [vmem:[#allocation2 + $0x80] sm:$0xff]
    %v56 = vld [vmem:[#allocation2 + $0x88] sm:$0xff]
    %v57 = vld [vmem:[#allocation2 + $0x90] sm:$0xff]
    %v58 = vld [vmem:[#allocation2 + $0x98] sm:$0xff]
    %v59 = vld [vmem:[#allocation2 + $0xa0] sm:$0xff]
    %v60 = vld [vmem:[#allocation2 + $0xa8] sm:$0xff]
    %v61 = vld [vmem:[#allocation2 + $0xb0] sm:$0xff]
    %v62 = vld [vmem:[#allocation2 + $0xb8] sm:$0xff]
    %v63 = vld [vmem:[#allocation2 + $0xc0] sm:$0xff]
    %v64 = vld [vmem:[#allocation2 + $0xc8] sm:$0xff]
    %v65 = vld [vmem:[#allocation2 + $0xd0] sm:$0xff]
    %v66 = vld [vmem:[#allocation2 + $0xd8] sm:$0xff]
    %v67 = vld [vmem:[#allocation2 + $0xe0] sm:$0xff]
    %v68 = vld [vmem:[#allocation2 + $0xe8] sm:$0xff]
    %v69 = vld [vmem:[#allocation2 + $0xf0] sm:$0xff]
    %v70 = vld [vmem:[#allocation2 + $0xf8] sm:$0xff]
    %72 = vset.pattern.permute.xlu0 8
    %73 = vperm.xlu0 %72, %v38
    %v74 = vpop.permute.xlu0 %73
    %vm76 = vcmask 64512
    %v77 = vsel %vm76, %v38, 0
    %v80 = vsel %vm76, %v39, 0
    %v83 = vsel %vm76, %v40, 0
    %v86 = vsel %vm76, %v41, 0
    %v89 = vsel %vm76, %v42, 0
    %v92 = vsel %vm76, %v43, 0
    %v95 = vsel %vm76, %v44, 0
    %v98 = vsel %vm76, %v45, 0
    %v101 = vsel %vm76, %v46, 0
    %v104 = vsel %vm76, %v47, 0
    %v107 = vsel %vm76, %v48, 0
    %v110 = vsel %vm76, %v49, 0
    %v113 = vsel %vm76, %v50, 0
    %v116 = vsel %vm76, %v51, 0
    %v119 = vsel %vm76, %v52, 0
    %v122 = vsel %vm76, %v53, 0
    %v125 = vsel %vm76, %v54, 0
    %v128 = vsel %vm76, %v55, 0
    %v131 = vsel %vm76, %v56, 0
    %v134 = vsel %vm76, %v57, 0
    %v137 = vsel %vm76, %v58, 0
    %v140 = vsel %vm76, %v59, 0
    %v143 = vsel %vm76, %v60, 0
    %v146 = vsel %vm76, %v61, 0
    %v149 = vsel %vm76, %v62, 0
    %v152 = vsel %vm76, %v63, 0
    %v155 = vsel %vm76, %v64, 0
    %v158 = vsel %vm76, %v65, 0
    %v161 = vsel %vm76, %v66, 0
    %v164 = vsel %vm76, %v67, 0
    %v167 = vsel %vm76, %v68, 0
    %v170 = vsel %vm76, %v69, 0
    %v173 = vsel %vm76, %v70, 0
    %175 = vmatprep.subr.mxu0 0.0
    %176 = vmatpush1.xpose.msra.mxu0 %v80
    %177 = vmatprep.subr.mxu0 0.0
    %178 = vmatpush1.xpose.msra.mxu0 %v83
    %179 = vmatprep.subr.mxu0 0.0
    %180 = vmatpush1.xpose.msra.mxu0 %v86
    %181 = vmatprep.subr.mxu0 0.0
    %182 = vmatpush1.xpose.msra.mxu0 %v89
    %183 = vmatprep.subr.mxu0 0.0
    %184 = vmatpush1.xpose.msra.mxu0 %v92
    %185 = vmatprep.subr.mxu0 0.0
    %186 = vmatpush1.xpose.msra.mxu0 %v95
    %187 = vmatprep.subr.mxu0 0.0
    %188 = vmatpush1.xpose.msra.mxu0 %v98
    %189 = vmatprep.subr.mxu0 0.0
    %190 = vmatpush1.xpose.msra.mxu0 %v101
    %191 = vmatprep.subr.mxu0 0.0
    %192 = vmatpush1.xpose.msra.mxu0 %v104
    %193 = vmatprep.subr.mxu0 0.0
    %194 = vmatpush1.xpose.msra.mxu0 %v107
    %195 = vmatprep.subr.mxu0 0.0
    %196 = vmatpush1.xpose.msra.mxu0 %v110
    %197 = vmatprep.subr.mxu0 0.0
    %198 = vmatpush1.xpose.msra.mxu0 %v113
    %199 = vmatprep.subr.mxu0 0.0
    %200 = vmatpush1.xpose.msra.mxu0 %v116
    %201 = vmatprep.subr.mxu0 0.0
    %202 = vmatpush1.xpose.msra.mxu0 %v119
    %203 = vmatprep.subr.mxu0 0.0
    %204 = vmatpush1.xpose.msra.mxu0 %v122
    %205 = vmatprep.subr.mxu0 0.0
    %206 = vmatpush1.xpose.msra.mxu0 %v125
    %207 = vmatprep.subr.mxu0 0.0
    %208 = vmatpush1.xpose.msra.mxu0 %v128
    %209 = vmatprep.subr.mxu0 0.0
    %210 = vmatpush1.xpose.msra.mxu0 %v131
    %211 = vmatprep.subr.mxu0 0.0
    %212 = vmatpush1.xpose.msra.mxu0 %v134
    %213 = vmatprep.subr.mxu0 0.0
    %214 = vmatpush1.xpose.msra.mxu0 %v137
    %215 = vmatprep.subr.mxu0 0.0
    %216 = vmatpush1.xpose.msra.mxu0 %v140
    %217 = vmatprep.subr.mxu0 0.0
    %218 = vmatpush1.xpose.msra.mxu0 %v143
    %219 = vmatprep.subr.mxu0 0.0
    %220 = vmatpush1.xpose.msra.mxu0 %v146
    %221 = vmatprep.subr.mxu0 0.0
    %222 = vmatpush1.xpose.msra.mxu0 %v149
    %223 = vmatprep.subr.mxu0 0.0
    %224 = vmatpush1.xpose.msra.mxu0 %v152
    %225 = vmatprep.subr.mxu0 0.0
    %226 = vmatpush1.xpose.msra.mxu0 %v155
    %227 = vmatprep.subr.mxu0 0.0
    %228 = vmatpush1.xpose.msra.mxu0 %v158
    %229 = vmatprep.subr.mxu0 0.0
    %230 = vmatpush1.xpose.msra.mxu0 %v161
    %231 = vmatprep.subr.mxu0 0.0
    %232 = vmatpush1.xpose.msra.mxu0 %v164
    %233 = vmatprep.subr.mxu0 0.0
    %234 = vmatpush1.xpose.msra.mxu0 %v167
    %235 = vmatprep.subr.mxu0 0.0
    %236 = vmatpush1.xpose.msra.mxu0 %v170
    %237 = vmatprep.subr.mxu0 0.0
    %238 = vmatpush1.xpose.msra.mxu0 %v173
    %239 = vmatprep.mubr.f32.mxu0 0.0
    %240 = vmatmul.mubr.f32.gmra.mrb[0].mxu0 %v77
    %v241 = vpop.f32.mrb[0].mxu0
    %v242 = vadd.f32 %v74, %v241
    %v243 = vpop.f32.mrb[0].mxu0
    %v244 = vadd.f32 %v74, %v243
    %245 = vdwg.mxu0
    %v246 = vxor.u32 %v242, 2147483648
    %v247 = vxor.u32 %v244, 2147483648
    %v248 = vmul.f32 %v246, 1.442695
    %v249 = vpow.pop %v248
    %v250 = vmul.f32 %v247, 1.442695
    %v251 = vpow.pop %v250
    %v252 = vadd.f32 %v249, 1.0
    %v253 = vadd.f32 %v251, 1.0
    %v254 = vrcp.pop %v252
    %v255 = vmul.f32 1.0, %v254
    %v256 = vrcp.pop %v253
    %v257 = vmul.f32 1.0, %v256
    %258 = vset.pattern.permute.xlu0 22
    %259 = vperm.xlu0 %258, %v38
    %v260 = vpop.permute.xlu0 %259
    %262 = vset.pattern.permute.xlu0 16
    %263 = vperm.xlu0 %262, %v38
    %v264 = vpop.permute.xlu0 %263
    %v266 = vlaneseq
    %v267 = vshrl.u32 %v266, 7
    %v268 = vsub.s32 0, %v267
    %v269 = vrot.slane %v255, %v268
    %v270 = vlaneseq
    %v271 = vshrl.u32 %v270, 7
    %v272 = vsub.s32 0, %v271
    %v273 = vrot.slane %v257, %v272
    %v274 = vmul.f32 %v264, %v269
    %v275 = vmul.f32 %v264, %v273
    %v276 = vadd.f32 %v260, %v274
    %v277 = vadd.f32 %v260, %v275
    %278 = vset.pattern.permute.xlu0 17
    %279 = vperm.xlu0 %278, %v38
    %v280 = vpop.permute.xlu0 %279
    %v282 = vlaneseq
    %v283 = vshrl.u32 %v282, 7
    %v284 = vsub.s32 1, %v283
    %v285 = vrot.slane %v255, %v284
    %v286 = vlaneseq
    %v287 = vshrl.u32 %v286, 7
    %v288 = vsub.s32 1, %v287
    %v289 = vrot.slane %v257, %v288
    %v290 = vmul.f32 %v280, %v285
    %v291 = vmul.f32 %v280, %v289
    %v292 = vadd.f32 %v276, %v290
    %v293 = vadd.f32 %v277, %v291
    %294 = vset.pattern.permute.xlu0 18
    %295 = vperm.xlu0 %294, %v38
    %v296 = vpop.permute.xlu0 %295
    %v298 = vlaneseq
    %v299 = vshrl.u32 %v298, 7
    %v300 = vsub.s32 2, %v299
    %v301 = vrot.slane %v255, %v300
    %v302 = vlaneseq
    %v303 = vshrl.u32 %v302, 7
    %v304 = vsub.s32 2, %v303
    %v305 = vrot.slane %v257, %v304
    %v306 = vmul.f32 %v296, %v301
    %v307 = vmul.f32 %v296, %v305
    %v308 = vadd.f32 %v292, %v306
    %v309 = vadd.f32 %v293, %v307
    %310 = vset.pattern.permute.xlu0 19
    %311 = vperm.xlu0 %310, %v38
    %v312 = vpop.permute.xlu0 %311
    %v314 = vlaneseq
    %v315 = vshrl.u32 %v314, 7
    %v316 = vsub.s32 3, %v315
    %v317 = vrot.slane %v255, %v316
    %v318 = vlaneseq
    %v319 = vshrl.u32 %v318, 7
    %v320 = vsub.s32 3, %v319
    %v321 = vrot.slane %v257, %v320
    %v322 = vmul.f32 %v312, %v317
    %v323 = vmul.f32 %v312, %v321
    %v324 = vadd.f32 %v308, %v322
    %v325 = vadd.f32 %v309, %v323
    %326 = vset.pattern.permute.xlu0 20
    %327 = vperm.xlu0 %326, %v38
    %v328 = vpop.permute.xlu0 %327
    %v330 = vlaneseq
    %v331 = vshrl.u32 %v330, 7
    %v332 = vsub.s32 4, %v331
    %v333 = vrot.slane %v255, %v332
    %v334 = vlaneseq
    %v335 = vshrl.u32 %v334, 7
    %v336 = vsub.s32 4, %v335
    %v337 = vrot.slane %v257, %v336
    %v338 = vmul.f32 %v328, %v333
    %v339 = vmul.f32 %v328, %v337
    %v340 = vadd.f32 %v324, %v338
    %v341 = vadd.f32 %v325, %v339
    %342 = vset.pattern.permute.xlu0 21
    %343 = vperm.xlu0 %342, %v38
    %v344 = vpop.permute.xlu0 %343
    %v346 = vlaneseq
    %v347 = vshrl.u32 %v346, 7
    %v348 = vsub.s32 5, %v347
    %v349 = vrot.slane %v255, %v348
    %v350 = vlaneseq
    %v351 = vshrl.u32 %v350, 7
    %v352 = vsub.s32 5, %v351
    %v353 = vrot.slane %v257, %v352
    %v354 = vmul.f32 %v344, %v349
    %v355 = vmul.f32 %v344, %v353
    %v356 = vadd.f32 %v340, %v354
    %v357 = vadd.f32 %v341, %v355
    %v358 = vxor.u32 %v356, 2147483648
    %v359 = vxor.u32 %v357, 2147483648
    %v360 = vmul.f32 %v358, 1.442695
    %v361 = vpow.pop %v360
    %v362 = vmul.f32 %v359, 1.442695
    %v363 = vpow.pop %v362
    %v364 = vadd.f32 %v361, 1.0
    %v365 = vadd.f32 %v363, 1.0
    %v366 = vrcp.pop %v364
    %v367 = vmul.f32 1.0, %v366
    %v368 = vrcp.pop %v365
    %v369 = vmul.f32 1.0, %v368
    %370 = vset.pattern.permute.xlu0 28
    %371 = vperm.xlu0 %370, %v38
    %v372 = vpop.permute.xlu0 %371
    %374 = vset.pattern.permute.xlu0 24
    %375 = vperm.xlu0 %374, %v38
    %v376 = vpop.permute.xlu0 %375
    %v378 = vmul.f32 %v376, %v367
    %v379 = vmul.f32 %v376, %v369
    %v380 = vadd.f32 %v372, %v378
    %v381 = vadd.f32 %v372, %v379
    %382 = vset.pattern.permute.xlu0 25
    %383 = vperm.xlu0 %382, %v38
    %v384 = vpop.permute.xlu0 %383
    %v388 = vrot.slane %v367, 1
    %v389 = vrot.slane %v369, 1
    %v392 = vmul.f32 %v384, %v388
    %v393 = vmul.f32 %v384, %v389
    %v394 = vadd.f32 %v380, %v392
    %v395 = vadd.f32 %v381, %v393
    %396 = vset.pattern.permute.xlu0 26
    %397 = vperm.xlu0 %396, %v38
    %v398 = vpop.permute.xlu0 %397
    %v400 = vrot.slane %v367, 2
    %v401 = vrot.slane %v369, 2
    %v404 = vmul.f32 %v398, %v400
    %v405 = vmul.f32 %v398, %v401
    %v406 = vadd.f32 %v394, %v404
    %v407 = vadd.f32 %v395, %v405
    %408 = vset.pattern.permute.xlu0 27
    %409 = vperm.xlu0 %408, %v38
    %v410 = vpop.permute.xlu0 %409
    %v412 = vrot.slane %v367, 3
    %v413 = vrot.slane %v369, 3
    %v416 = vmul.f32 %v410, %v412
    %v417 = vmul.f32 %v410, %v413
    %v418 = vadd.f32 %v406, %v416
    %v419 = vadd.f32 %v407, %v417
    %v420 = vxor.u32 %v418, 2147483648
    %v421 = vxor.u32 %v419, 2147483648
    %v422 = vmul.f32 %v420, 1.442695
    %v423 = vpow.pop %v422
    %v424 = vmul.f32 %v421, 1.442695
    %v425 = vpow.pop %v424
    %v426 = vadd.f32 %v423, 1.0
    %v427 = vadd.f32 %v425, 1.0
    %v428 = vrcp.pop %v426
    %v429 = vmul.f32 1.0, %v428
    %v430 = vrcp.pop %v427
    %v431 = vmul.f32 1.0, %v430
    %v434 = vcombine.low %v429, %v431
    %v436 = vunpack.c.l.s4 1966171168
    %v437 = vunpack.c.0.s8 %v436
    %v438 = vlaneseq
    %v439 = vshrl.u32 %v438, 7
    %v440 = vsub.s32 %v437, %v439
    %v441 = vrot.slane %v434, %v440
    %v443 = vunpack.c.l.s4 1966171168
    %v444 = vunpack.c.0.s8 %v443
    %v445 = vlaneseq
    %v446 = vshrl.u32 %v445, 7
    %v447 = vsub.s32 %v444, %v446
    %v448 = vrot.slane %v441, %v447
    %v450 = vlaneseq
    %vm451 = vcmp.ge.s32.totalorder %v450, 0
    %vm452 = vcmp.lt.s32.totalorder %v450, 256
    %vm453 = vmand %vm451, %vm452
    %454 = vst.msk [vmem:[#allocation7] sm:$0x3] %vm453, %v448
    // Predicated region
    $region18: #{mlp_forward.1} parent=1 // pred_check
      _
    $region19: #{mlp_forward.1} parent=1 // pred_check_branch
      %456 = sbr.rel (0) target = $region21
    $region20: #{mlp_forward.1} parent=1 // pred_region
      %s458 = ssub.s32 32, 16
      %459 = vsyncadd [#allocation4], %s458
      %s461 = sshll.u32 [#allocation7], 4
      %s462 = int_to_ptr.vmem [resolvable:$true] %s461
      %464 = dma.vmem_to_hbm [thread:$0]  %s462, 16, %s2, [#allocation4]
    $region21: #{mlp_forward.1} parent=1 // pred_fallthru
      _
    // Predicated region
    $region22: #{mlp_forward.1} parent=1 // pred_check
      _
    $region23: #{mlp_forward.1} parent=1 // pred_check_branch
      %466 = sbr.rel (0) target = $region25
    $region24: #{mlp_forward.1} parent=1 // pred_region
      %467 = dma.done [#allocation4], 32
    $region25: #{mlp_forward.1} parent=1 // pred_fallthru
      _
    %468 = vsyncpa [#allocation3], 1
    %469 = vsyncpa [#allocation6], 1
    %470 = vsyncpa [#allocation4], 1

</llo_original>
